<compile_context>
chip_gen: v7x
topology: tpu7x:2x2x1
jax: 0.10.0
libtpu: 0.0.40
codegen_flags: <defaults>
</compile_context>

<pallas_src>
import functools

import jax
import jax.numpy as jnp
from jax.experimental import pallas as pl
from jax.experimental.pallas import tpu as pltpu


def dqn_kernel(x_ref, w1_ref, b1_ref, w2_ref, b2_ref, w3_ref, b3_ref, o_ref):
    # One batch tile per grid step; all three matmuls + biases + ReLUs fused.
    # Matmul operands in bf16 (MXU), accumulation + elementwise in f32 (VPU).
    x = x_ref[...].astype(jnp.bfloat16)

    h1 = jnp.dot(x, w1_ref[...], preferred_element_type=jnp.float32)
    h1 = jnp.maximum(h1 + b1_ref[...], 0.0)          # bias (1, 64) broadcasts over batch

    h2 = jnp.dot(h1.astype(jnp.bfloat16), w2_ref[...], preferred_element_type=jnp.float32)
    h2 = jnp.maximum(h2 + b2_ref[...], 0.0)

    h3 = jnp.dot(h2.astype(jnp.bfloat16), w3_ref[...], preferred_element_type=jnp.float32)
    o_ref[...] = (h3 + b3_ref[...]).astype(o_ref.dtype)


def _round_up(n, m):
    return ((n + m - 1) // m) * m


_MAX_TILE_B = 2048  # rows per batch tile; ~0.4 MiB of VMEM/tile at these layer widths


@functools.partial(jax.jit, static_argnames=("tile_b",))
def dqn_forward(x, params, *, tile_b=None):
    w1, b1, w2, b2, w3, b3 = params
    B, in_size = x.shape
    out_size = w3.shape[1]

    # --- batch tile selection (all Python ints at trace time) -------------------
    if tile_b is None:
        tile_b = min(_MAX_TILE_B, _round_up(B, 16))
        # v7x megacore: guarantee >= 2 batch tiles whenever there are enough rows,
        # so the "parallel" batch axis can actually occupy both TensorCores.
        if B >= 32 and pl.cdiv(B, tile_b) < 2:
            tile_b = _round_up(pl.cdiv(B, 2), 16)
    # Multiple of 8 (f32 sublanes) and never larger than the padded batch.
    tile_b = max(8, min(_round_up(tile_b, 8), _round_up(B, 8)))

    grid = (pl.cdiv(B, tile_b),)

    # Weights in bf16 for the MXU (cast once per call, ~22.5 KB); biases stay f32.
    w1b = w1.astype(jnp.bfloat16)
    w2b = w2.astype(jnp.bfloat16)
    w3b = w3.astype(jnp.bfloat16)

    # Weights/biases: constant index_map -> loaded once, VMEM-resident across the grid.
    resident = lambda a: pl.BlockSpec(a.shape, lambda i: (0,) * a.ndim)

    out = pl.pallas_call(
        dqn_kernel,
        out_shape=jax.ShapeDtypeStruct((B, out_size), jnp.float32),
        grid=grid,
        in_specs=[
            pl.BlockSpec((tile_b, in_size), lambda i: (i, 0)),   # x: tiled over batch
            resident(w1b), resident(b1),
            resident(w2b), resident(b2),
            resident(w3b), resident(b3),
        ],
        out_specs=pl.BlockSpec((tile_b, out_size), lambda i: (i, 0)),
        compiler_params=pltpu.CompilerParams(
            dimension_semantics=("parallel",),   # shard batch tiles across TCs on v7x
        ),
    )(x, w1b, b1, w2b, b2, w3b, b3)

    return out


def init_dqn_params(key, input_size, output_size, hidden=64):
    """Deterministic PyTorch-style (uniform +/- 1/sqrt(fan_in)) init, stored as [in, out]."""
    def linear(key, fan_in, fan_out):
        kw, kb = jax.random.split(key)
        bound = 1.0 / jnp.sqrt(fan_in)
        w = jax.random.uniform(kw, (fan_in, fan_out), jnp.float32, -bound, bound)
        b = jax.random.uniform(kb, (1, fan_out), jnp.float32, -bound, bound)
        return w, b

    k1, k2, k3 = jax.random.split(key, 3)
    w1, b1 = linear(k1, input_size, hidden)
    w2, b2 = linear(k2, hidden, hidden)
    w3, b3 = linear(k3, hidden, output_size)
    return (w1, b1, w2, b2, w3, b3)


def _ref_forward_f32(x, params):
    """PyTorch-equivalent full-f32 reference."""
    w1, b1, w2, b2, w3, b3 = params
    h = jnp.maximum(x @ w1 + b1, 0.0)
    h = jnp.maximum(h @ w2 + b2, 0.0)
    return h @ w3 + b3


def _ref_forward_bf16(x, params):
    """Reference that matches the kernel's numerics: bf16 operands, f32 accumulate."""
    w1, b1, w2, b2, w3, b3 = params
    bf = lambda a: a.astype(jnp.bfloat16).astype(jnp.float32)
    hi = jax.lax.Precision.HIGHEST
    h = jnp.maximum(jnp.dot(bf(x), bf(w1), precision=hi) + b1, 0.0)
    h = jnp.maximum(jnp.dot(bf(h), bf(w2), precision=hi) + b2, 0.0)
    return jnp.dot(bf(h), bf(w3), precision=hi) + b3


if __name__ == "__main__":
    key = jax.random.PRNGKey(0)
    kx, kp = jax.random.split(key)

    batch = 8
    input_size = 16    # e.g. flattened observation vector
    output_size = 8    # number of discrete actions

    params = init_dqn_params(kp, input_size, output_size)
    x = jax.random.normal(kx, (batch, input_size), dtype=jnp.float32)

    # Small batch (single tile, block == full array).
    out = jax.block_until_ready(dqn_forward(x, params))
    assert out.shape == (batch, output_size)
    assert jnp.allclose(out, _ref_forward_bf16(x, params), atol=1e-3), \
        "mismatch vs. bf16-matched reference"
    assert jnp.allclose(out, _ref_forward_f32(x, params), atol=5e-2, rtol=5e-2), \
        "mismatch vs. f32 reference"

    # Multi-tile grid + masked ragged edge block (300 rows, tile_b=128 -> grid=(3,)).
    x2 = jax.random.normal(jax.random.PRNGKey(1), (300, input_size), dtype=jnp.float32)
    out2 = jax.block_until_ready(dqn_forward(x2, params, tile_b=128))
    assert out2.shape == (300, output_size)
    assert jnp.allclose(out2, _ref_forward_bf16(x2, params), atol=1e-3), \
        "mismatch vs. bf16-matched reference (tiled)"
    assert jnp.allclose(out2, _ref_forward_f32(x2, params), atol=5e-2, rtol=5e-2), \
        "mismatch vs. f32 reference (tiled)"

    # Default tile-selection path with a larger ragged batch (exercises the >=2-tile split).
    x3 = jax.random.normal(jax.random.PRNGKey(2), (1000, input_size), dtype=jnp.float32)
    out3 = jax.block_until_ready(dqn_forward(x3, params))
    assert out3.shape == (1000, output_size)
    assert jnp.allclose(out3, _ref_forward_bf16(x3, params), atol=1e-3), \
        "mismatch vs. bf16-matched reference (auto tile)"

    print("KERNEL_OK")
</pallas_src>

<mosaic_0001>
module attributes {stable_mosaic.version = 11 : i64} {
  func.func @dqn_kernel(%arg0: i32, %arg1: memref<8x16xf32, #tpu.memory_space<vmem>>, %arg2: memref<16x64xbf16, #tpu.memory_space<vmem>>, %arg3: memref<1x64xf32, #tpu.memory_space<vmem>>, %arg4: memref<64x64xbf16, #tpu.memory_space<vmem>>, %arg5: memref<1x64xf32, #tpu.memory_space<vmem>>, %arg6: memref<64x8xbf16, #tpu.memory_space<vmem>>, %arg7: memref<1x8xf32, #tpu.memory_space<vmem>>, %arg8: memref<8x8xf32, #tpu.memory_space<vmem>>) attributes {dimension_semantics = [#tpu.dimension_semantics<parallel>], iteration_bounds = array<i64: 1>, scalar_prefetch = 0 : i64, scratch_operands = 0 : i64, tpu.core_type = #tpu.core_type<tc>, window_params = [{transform_indices = @transform_0, window_bounds = array<i64: 8, 16>}, {pipeline_mode = #tpu.pipeline_mode<synchronous>, transform_indices = @transform_1, window_bounds = array<i64: 16, 64>}, {pipeline_mode = #tpu.pipeline_mode<synchronous>, transform_indices = @transform_2, window_bounds = array<i64: 1, 64>}, {pipeline_mode = #tpu.pipeline_mode<synchronous>, transform_indices = @transform_3, window_bounds = array<i64: 64, 64>}, {pipeline_mode = #tpu.pipeline_mode<synchronous>, transform_indices = @transform_4, window_bounds = array<i64: 1, 64>}, {pipeline_mode = #tpu.pipeline_mode<synchronous>, transform_indices = @transform_5, window_bounds = array<i64: 64, 8>}, {pipeline_mode = #tpu.pipeline_mode<synchronous>, transform_indices = @transform_6, window_bounds = array<i64: 1, 8>}, {transform_indices = @transform_7, window_bounds = array<i64: 8, 8>}]} {
    %c0 = arith.constant 0 : index
    %c0_0 = arith.constant 0 : index
    %0 = vector.load %arg1[%c0, %c0_0] : memref<8x16xf32, #tpu.memory_space<vmem>>, vector<8x16xf32>
    %1 = arith.truncf %0 : vector<8x16xf32> to vector<8x16xbf16>
    %c0_1 = arith.constant 0 : index
    %c0_2 = arith.constant 0 : index
    %2 = vector.load %arg2[%c0_1, %c0_2] : memref<16x64xbf16, #tpu.memory_space<vmem>>, vector<16x64xbf16>
    %cst = arith.constant dense<0.000000e+00> : vector<8x64xf32>
    %3 = tpu.matmul %1, %2, %cst {dimension_numbers = #tpu.dot_dimension_numbers<[1], [0], [0], [1], [0, 0, 1, 1], [], []>} : vector<8x16xbf16>, vector<16x64xbf16>, vector<8x64xf32> -> vector<8x64xf32>
    %c0_3 = arith.constant 0 : index
    %c0_4 = arith.constant 0 : index
    %4 = vector.load %arg3[%c0_3, %c0_4] : memref<1x64xf32, #tpu.memory_space<vmem>>, vector<1x64xf32>
    %5 = vector.broadcast %4 : vector<1x64xf32> to vector<8x64xf32>
    %6 = arith.addf %3, %5 : vector<8x64xf32>
    %cst_5 = arith.constant 0.000000e+00 : f32
    %7 = vector.broadcast %cst_5 : f32 to vector<8x64xf32>
    %8 = arith.maximumf %6, %7 : vector<8x64xf32>
    %9 = arith.truncf %8 : vector<8x64xf32> to vector<8x64xbf16>
    %c0_6 = arith.constant 0 : index
    %c0_7 = arith.constant 0 : index
    %10 = vector.load %arg4[%c0_6, %c0_7] : memref<64x64xbf16, #tpu.memory_space<vmem>>, vector<64x64xbf16>
    %cst_8 = arith.constant dense<0.000000e+00> : vector<8x64xf32>
    %11 = tpu.matmul %9, %10, %cst_8 {dimension_numbers = #tpu.dot_dimension_numbers<[1], [0], [0], [1], [0, 0, 1, 1], [], []>} : vector<8x64xbf16>, vector<64x64xbf16>, vector<8x64xf32> -> vector<8x64xf32>
    %c0_9 = arith.constant 0 : index
    %c0_10 = arith.constant 0 : index
    %12 = vector.load %arg5[%c0_9, %c0_10] : memref<1x64xf32, #tpu.memory_space<vmem>>, vector<1x64xf32>
    %13 = vector.broadcast %12 : vector<1x64xf32> to vector<8x64xf32>
    %14 = arith.addf %11, %13 : vector<8x64xf32>
    %cst_11 = arith.constant 0.000000e+00 : f32
    %15 = vector.broadcast %cst_11 : f32 to vector<8x64xf32>
    %16 = arith.maximumf %14, %15 : vector<8x64xf32>
    %17 = arith.truncf %16 : vector<8x64xf32> to vector<8x64xbf16>
    %c0_12 = arith.constant 0 : index
    %c0_13 = arith.constant 0 : index
    %18 = vector.load %arg6[%c0_12, %c0_13] : memref<64x8xbf16, #tpu.memory_space<vmem>>, vector<64x8xbf16>
    %cst_14 = arith.constant dense<0.000000e+00> : vector<8x8xf32>
    %19 = tpu.matmul %17, %18, %cst_14 {dimension_numbers = #tpu.dot_dimension_numbers<[1], [0], [0], [1], [0, 0, 1, 1], [], []>} : vector<8x64xbf16>, vector<64x8xbf16>, vector<8x8xf32> -> vector<8x8xf32>
    %c0_15 = arith.constant 0 : index
    %c0_16 = arith.constant 0 : index
    %20 = vector.load %arg7[%c0_15, %c0_16] : memref<1x8xf32, #tpu.memory_space<vmem>>, vector<1x8xf32>
    %21 = vector.broadcast %20 : vector<1x8xf32> to vector<8x8xf32>
    %22 = arith.addf %19, %21 : vector<8x8xf32>
    %c0_17 = arith.constant 0 : index
    %c0_18 = arith.constant 0 : index
    %23 = vector.load %arg8[%c0_17, %c0_18] : memref<8x8xf32, #tpu.memory_space<vmem>>, vector<8x8xf32>
    tpu.vector_store %arg8[%c0_17, %c0_18], %22 {strides = array<i32>} : memref<8x8xf32, #tpu.memory_space<vmem>>, vector<8x8xf32>,
    return
  }
  func.func @transform_0(%arg0: i32) -> (i32, i32) {
    %c0_i32 = arith.constant 0 : i32
    %c0_i32_0 = arith.constant 0 : i32
    return %arg0, %c0_i32 : i32, i32
  }
  func.func @transform_1(%arg0: i32) -> (i32, i32) {
    %c0_i32 = arith.constant 0 : i32
    %c0_i32_0 = arith.constant 0 : i32
    %c0_i32_1 = arith.constant 0 : i32
    return %c0_i32, %c0_i32_0 : i32, i32
  }
  func.func @transform_2(%arg0: i32) -> (i32, i32) {
    %c0_i32 = arith.constant 0 : i32
    %c0_i32_0 = arith.constant 0 : i32
    %c0_i32_1 = arith.constant 0 : i32
    return %c0_i32, %c0_i32_0 : i32, i32
  }
  func.func @transform_3(%arg0: i32) -> (i32, i32) {
    %c0_i32 = arith.constant 0 : i32
    %c0_i32_0 = arith.constant 0 : i32
    %c0_i32_1 = arith.constant 0 : i32
    return %c0_i32, %c0_i32_0 : i32, i32
  }
  func.func @transform_4(%arg0: i32) -> (i32, i32) {
    %c0_i32 = arith.constant 0 : i32
    %c0_i32_0 = arith.constant 0 : i32
    %c0_i32_1 = arith.constant 0 : i32
    return %c0_i32, %c0_i32_0 : i32, i32
  }
  func.func @transform_5(%arg0: i32) -> (i32, i32) {
    %c0_i32 = arith.constant 0 : i32
    %c0_i32_0 = arith.constant 0 : i32
    %c0_i32_1 = arith.constant 0 : i32
    return %c0_i32, %c0_i32_0 : i32, i32
  }
  func.func @transform_6(%arg0: i32) -> (i32, i32) {
    %c0_i32 = arith.constant 0 : i32
    %c0_i32_0 = arith.constant 0 : i32
    %c0_i32_1 = arith.constant 0 : i32
    return %c0_i32, %c0_i32_0 : i32, i32
  }
  func.func @transform_7(%arg0: i32) -> (i32, i32) {
    %c0_i32 = arith.constant 0 : i32
    %c0_i32_0 = arith.constant 0 : i32
    return %arg0, %c0_i32 : i32, i32
  }
}

</mosaic_0001>

<llo_original>
// kernel: dqn_forward.1
$region0: #{dqn_forward.1}
  #allocation0 [shape = 'u32[]', space=smem, size = 0x4, offset = 0x4, fixed_abs, tag = 'smem constant byte address 0x4 - core index']
  #allocation1 [shape = 'u32[144,128]{1,0:T(1,128)}', space=vmem, size = 0x12000, scoped, tag = 'internal scratch']
  %s0 = inlined_call_operand.vmem [shape: f32[8,16], index: 0, kind: input, shape index: {}]
  %s1 = inlined_call_operand.vmem [shape: bf16[16,64], index: 1, kind: input, shape index: {}]
  %s2 = inlined_call_operand.vmem [shape: f32[1,64], index: 2, kind: input, shape index: {}]
  %s3 = inlined_call_operand.vmem [shape: bf16[64,64], index: 3, kind: input, shape index: {}]
  %s4 = inlined_call_operand.vmem [shape: f32[1,64], index: 4, kind: input, shape index: {}]
  %s5 = inlined_call_operand.vmem [shape: bf16[64,8], index: 5, kind: input, shape index: {}]
  %s6 = inlined_call_operand.vmem [shape: f32[1,8], index: 6, kind: input, shape index: {}]
  %s7 = inlined_call_operand.hbm [shape: f32[8,8], index: 7, kind: output, shape index: {}]
  %s8 = sld [smem:[#allocation0]]
  $region38: #{dqn_forward.1} parent=0
    _
  %s10 = ssub.s32 1, %s8
  %s11 = scalar_select 0, %s10, %s8
  $region1: #{dqn_forward.1} parent=0
    #allocation2 [shape = 'u8[4096]{0}', space=vmem, size = 0x1000, scoped, tag = 'output window, operand 0, single buffered']
    #allocation3 [shape = 's32[1]{0}', space=sflag, size = 0x4, scoped, tag = 'scoped memory for dqn_forward.1']
    %12 = vsyncpa [#allocation3], 0
    // Predicated region
    $region2: #{dqn_forward.1} parent=1 // pred_check
      _
    $region3: #{dqn_forward.1} parent=1 // pred_check_branch
      %14 = sbr.rel (0) target = $region5
    $region4: #{dqn_forward.1} parent=1 // pred_region
      _
    $region5: #{dqn_forward.1} parent=1 // pred_fallthru
      _
    // Predicated region
    $region6: #{dqn_forward.1} parent=1 // pred_check
      _
    $region7: #{dqn_forward.1} parent=1 // pred_check_branch
      %16 = sbr.rel (0) target = $region9
    $region8: #{dqn_forward.1} parent=1 // pred_region
      _
    $region9: #{dqn_forward.1} parent=1 // pred_fallthru
      _
    // Predicated region
    $region10: #{dqn_forward.1} parent=1 // pred_check
      _
    $region11: #{dqn_forward.1} parent=1 // pred_check_branch
      %18 = sbr.rel (0) target = $region13
    $region12: #{dqn_forward.1} parent=1 // pred_region
      _
    $region13: #{dqn_forward.1} parent=1 // pred_fallthru
      _
    // Predicated region
    $region14: #{dqn_forward.1} parent=1 // pred_check
      _
    $region15: #{dqn_forward.1} parent=1 // pred_check_branch
      %20 = sbr.rel (0) target = $region17
    $region16: #{dqn_forward.1} parent=1 // pred_region
      _
    $region17: #{dqn_forward.1} parent=1 // pred_fallthru
      _
    // Predicated region
    $region18: #{dqn_forward.1} parent=1 // pred_check
      _
    $region19: #{dqn_forward.1} parent=1 // pred_check_branch
      %22 = sbr.rel (0) target = $region21
    $region20: #{dqn_forward.1} parent=1 // pred_region
      _
    $region21: #{dqn_forward.1} parent=1 // pred_fallthru
      _
    // Predicated region
    $region22: #{dqn_forward.1} parent=1 // pred_check
      _
    $region23: #{dqn_forward.1} parent=1 // pred_check_branch
      %24 = sbr.rel (0) target = $region25
    $region24: #{dqn_forward.1} parent=1 // pred_region
      _
    $region25: #{dqn_forward.1} parent=1 // pred_fallthru
      _
    // Predicated region
    $region26: #{dqn_forward.1} parent=1 // pred_check
      _
    $region27: #{dqn_forward.1} parent=1 // pred_check_branch
      %26 = sbr.rel (0) target = $region29
    $region28: #{dqn_forward.1} parent=1 // pred_region
      _
    $region29: #{dqn_forward.1} parent=1 // pred_fallthru
      _
    %v28 = vld [vmem:[%s0] sm:$0xff]
    %v29 = vpack.c.bf16 %v28, %v28
    %v30 = vld [vmem:[%s1] sm:$0xf]
    %v31 = vld [vmem:[%s1 + $0x4] sm:$0xf]
    %v32 = vld [vmem:[%s2] sm:$0x1]
    %v34 = vlaneseq
    %v35 = vshrl.u32 %v34, 7
    %v36 = vsub.s32 0, %v35
    %v37 = vrot.slane %v32, %v36
    %v41 = vunpack.c.l.b16 %v30
    %v42 = vunpack.c.l.b16 %v31
    %v43 = vpack.c.b16 %v42, %v41
    %vm45 = vcmask 130048
    %v47 = vsel %vm45, %v29, 0
    %49 = vmatprep.subr.bf16.mxu0 0
    %50 = vmatpush1.bf16.msra.mxu0 %v43
    %51 = vmatprep.subr.bf16.mxu0 0
    %52 = vmatpush1.bf16.msra.mxu0 0
    %53 = vmatprep.subr.bf16.mxu0 0
    %54 = vmatpush1.bf16.msra.mxu0 0
    %55 = vmatprep.subr.bf16.mxu0 0
    %56 = vmatpush1.bf16.msra.mxu0 0
    %57 = vmatprep.subr.bf16.mxu0 0
    %58 = vmatpush1.bf16.msra.mxu0 0
    %59 = vmatprep.subr.bf16.mxu0 0
    %60 = vmatpush1.bf16.msra.mxu0 0
    %61 = vmatprep.subr.bf16.mxu0 0
    %62 = vmatpush1.bf16.msra.mxu0 0
    %63 = vmatprep.subr.bf16.mxu0 0
    %64 = vmatpush1.bf16.msra.mxu0 0
    %65 = vmatprep.subr.bf16.mxu0 0
    %66 = vmatpush1.bf16.msra.mxu0 0
    %67 = vmatprep.subr.bf16.mxu0 0
    %68 = vmatpush1.bf16.msra.mxu0 0
    %69 = vmatprep.subr.bf16.mxu0 0
    %70 = vmatpush1.bf16.msra.mxu0 0
    %71 = vmatprep.subr.bf16.mxu0 0
    %72 = vmatpush1.bf16.msra.mxu0 0
    %73 = vmatprep.subr.bf16.mxu0 0
    %74 = vmatpush1.bf16.msra.mxu0 0
    %75 = vmatprep.subr.bf16.mxu0 0
    %76 = vmatpush1.bf16.msra.mxu0 0
    %77 = vmatprep.subr.bf16.mxu0 0
    %78 = vmatpush1.bf16.msra.mxu0 0
    %79 = vmatprep.subr.bf16.mxu0 0
    %80 = vmatpush1.bf16.msra.mxu0 0
    %81 = vmatprep.mubr.bf16.mxu0 0
    %82 = vmatmul.mubr.bf16.gmra.mrb[0].mxu0 %v47
    %v83 = vpop.f32.mrb[0].mxu0
    %v84 = vadd.f32 %v37, %v83
    %v85 = vpop.f32.mrb[0].mxu0
    %v86 = vpop.f32.mrb[0].mxu0
    %v87 = vpop.f32.mrb[0].mxu0
    %88 = vdwg.mxu0
    %v89 = vmax.f32 %v84, 0.0
    %v90 = vpack.c.bf16 %v89, %v89
    %v91 = vld [vmem:[%s3] sm:$0xf]
    %v92 = vld [vmem:[%s3 + $0x4] sm:$0xf]
    %v93 = vld [vmem:[%s3 + $0x8] sm:$0xf]
    %v94 = vld [vmem:[%s3 + $0xc] sm:$0xf]
    %v95 = vld [vmem:[%s3 + $0x10] sm:$0xf]
    %v96 = vld [vmem:[%s3 + $0x14] sm:$0xf]
    %v97 = vld [vmem:[%s3 + $0x18] sm:$0xf]
    %v98 = vld [vmem:[%s3 + $0x1c] sm:$0xf]
    %v99 = vld [vmem:[%s4] sm:$0x1]
    %v101 = vlaneseq
    %v102 = vshrl.u32 %v101, 7
    %v103 = vsub.s32 0, %v102
    %v104 = vrot.slane %v99, %v103
    %v114 = vunpack.c.l.b16 %v91
    %v115 = vunpack.c.l.b16 %v92
    %v116 = vunpack.c.l.b16 %v93
    %v117 = vunpack.c.l.b16 %v94
    %v118 = vunpack.c.l.b16 %v95
    %v119 = vunpack.c.l.b16 %v96
    %v120 = vunpack.c.l.b16 %v97
    %v121 = vunpack.c.l.b16 %v98
    %v122 = vpack.c.b16 %v115, %v114
    %v123 = vpack.c.b16 %v117, %v116
    %v124 = vpack.c.b16 %v119, %v118
    %v125 = vpack.c.b16 %v121, %v120
    %vm130 = vcmask 523264
    %v132 = vsel %vm130, %v90, 0
    %134 = vmatprep.subr.bf16.mxu0 0
    %135 = vmatpush1.bf16.msra.mxu0 %v122
    %136 = vmatprep.subr.bf16.mxu0 0
    %137 = vmatpush1.bf16.msra.mxu0 %v123
    %138 = vmatprep.subr.bf16.mxu0 0
    %139 = vmatpush1.bf16.msra.mxu0 %v124
    %140 = vmatprep.subr.bf16.mxu0 0
    %141 = vmatpush1.bf16.msra.mxu0 %v125
    %142 = vmatprep.subr.bf16.mxu0 0
    %143 = vmatpush1.bf16.msra.mxu0 0
    %144 = vmatprep.subr.bf16.mxu0 0
    %145 = vmatpush1.bf16.msra.mxu0 0
    %146 = vmatprep.subr.bf16.mxu0 0
    %147 = vmatpush1.bf16.msra.mxu0 0
    %148 = vmatprep.subr.bf16.mxu0 0
    %149 = vmatpush1.bf16.msra.mxu0 0
    %150 = vmatprep.subr.bf16.mxu0 0
    %151 = vmatpush1.bf16.msra.mxu0 0
    %152 = vmatprep.subr.bf16.mxu0 0
    %153 = vmatpush1.bf16.msra.mxu0 0
    %154 = vmatprep.subr.bf16.mxu0 0
    %155 = vmatpush1.bf16.msra.mxu0 0
    %156 = vmatprep.subr.bf16.mxu0 0
    %157 = vmatpush1.bf16.msra.mxu0 0
    %158 = vmatprep.subr.bf16.mxu0 0
    %159 = vmatpush1.bf16.msra.mxu0 0
    %160 = vmatprep.subr.bf16.mxu0 0
    %161 = vmatpush1.bf16.msra.mxu0 0
    %162 = vmatprep.subr.bf16.mxu0 0
    %163 = vmatpush1.bf16.msra.mxu0 0
    %164 = vmatprep.subr.bf16.mxu0 0
    %165 = vmatpush1.bf16.msra.mxu0 0
    %166 = vmatprep.mubr.bf16.mxu0 0
    %167 = vmatmul.mubr.bf16.gmra.mrb[0].mxu0 %v132
    %v168 = vpop.f32.mrb[0].mxu0
    %v169 = vadd.f32 %v104, %v168
    %v170 = vpop.f32.mrb[0].mxu0
    %v171 = vpop.f32.mrb[0].mxu0
    %v172 = vpop.f32.mrb[0].mxu0
    %173 = vdwg.mxu0
    %v174 = vmax.f32 %v169, 0.0
    %v175 = vpack.c.bf16 %v174, %v174
    %v176 = vld [vmem:[%s5] sm:$0xf]
    %v177 = vld [vmem:[%s5 + $0x4] sm:$0xf]
    %v178 = vld [vmem:[%s5 + $0x8] sm:$0xf]
    %v179 = vld [vmem:[%s5 + $0xc] sm:$0xf]
    %v180 = vld [vmem:[%s5 + $0x10] sm:$0xf]
    %v181 = vld [vmem:[%s5 + $0x14] sm:$0xf]
    %v182 = vld [vmem:[%s5 + $0x18] sm:$0xf]
    %v183 = vld [vmem:[%s5 + $0x1c] sm:$0xf]
    %v184 = vld [vmem:[%s6] sm:$0x1]
    %v186 = vlaneseq
    %v187 = vshrl.u32 %v186, 7
    %v188 = vsub.s32 0, %v187
    %v189 = vrot.slane %v184, %v188
    %v199 = vunpack.c.l.b16 %v176
    %v200 = vunpack.c.l.b16 %v177
    %v201 = vunpack.c.l.b16 %v178
    %v202 = vunpack.c.l.b16 %v179
    %v203 = vunpack.c.l.b16 %v180
    %v204 = vunpack.c.l.b16 %v181
    %v205 = vunpack.c.l.b16 %v182
    %v206 = vunpack.c.l.b16 %v183
    %v207 = vpack.c.b16 %v200, %v199
    %v208 = vpack.c.b16 %v202, %v201
    %v209 = vpack.c.b16 %v204, %v203
    %v210 = vpack.c.b16 %v206, %v205
    %v216 = vsel %vm130, %v175, 0
    %218 = vmatprep.subr.bf16.mxu0 0
    %219 = vmatpush1.bf16.msra.mxu0 %v207
    %220 = vmatprep.subr.bf16.mxu0 0
    %221 = vmatpush1.bf16.msra.mxu0 %v208
    %222 = vmatprep.subr.bf16.mxu0 0
    %223 = vmatpush1.bf16.msra.mxu0 %v209
    %224 = vmatprep.subr.bf16.mxu0 0
    %225 = vmatpush1.bf16.msra.mxu0 %v210
    %226 = vmatprep.subr.bf16.mxu0 0
    %227 = vmatpush1.bf16.msra.mxu0 0
    %228 = vmatprep.subr.bf16.mxu0 0
    %229 = vmatpush1.bf16.msra.mxu0 0
    %230 = vmatprep.subr.bf16.mxu0 0
    %231 = vmatpush1.bf16.msra.mxu0 0
    %232 = vmatprep.subr.bf16.mxu0 0
    %233 = vmatpush1.bf16.msra.mxu0 0
    %234 = vmatprep.subr.bf16.mxu0 0
    %235 = vmatpush1.bf16.msra.mxu0 0
    %236 = vmatprep.subr.bf16.mxu0 0
    %237 = vmatpush1.bf16.msra.mxu0 0
    %238 = vmatprep.subr.bf16.mxu0 0
    %239 = vmatpush1.bf16.msra.mxu0 0
    %240 = vmatprep.subr.bf16.mxu0 0
    %241 = vmatpush1.bf16.msra.mxu0 0
    %242 = vmatprep.subr.bf16.mxu0 0
    %243 = vmatpush1.bf16.msra.mxu0 0
    %244 = vmatprep.subr.bf16.mxu0 0
    %245 = vmatpush1.bf16.msra.mxu0 0
    %246 = vmatprep.subr.bf16.mxu0 0
    %247 = vmatpush1.bf16.msra.mxu0 0
    %248 = vmatprep.subr.bf16.mxu0 0
    %249 = vmatpush1.bf16.msra.mxu0 0
    %250 = vmatprep.mubr.bf16.mxu0 0
    %251 = vmatmul.mubr.bf16.gmra.mrb[0].mxu0 %v216
    %v252 = vpop.f32.mrb[0].mxu0
    %v253 = vadd.f32 %v189, %v252
    %v254 = vpop.f32.mrb[0].mxu0
    %v255 = vpop.f32.mrb[0].mxu0
    %v256 = vpop.f32.mrb[0].mxu0
    %257 = vdwg.mxu0
    %vm258 = vcmask 64512
    %259 = vst.msk [vmem:[#allocation2] sm:$0xff] %vm258, %v253
    // Predicated region
    $region30: #{dqn_forward.1} parent=1 // pred_check
      _
    $region31: #{dqn_forward.1} parent=1 // pred_check_branch
      %261 = sbr.rel (0) target = $region33
    $region32: #{dqn_forward.1} parent=1 // pred_region
      %s263 = ssub.s32 128, 128
      %264 = vsyncadd [#allocation3], %s263
      %s266 = sshll.u32 [#allocation2], 4
      %s267 = int_to_ptr.vmem [resolvable:$true] %s266
      %269 = dma.vmem_to_hbm [thread:$0]  %s267, 128, %s7, [#allocation3]
    $region33: #{dqn_forward.1} parent=1 // pred_fallthru
      _
    // Predicated region
    $region34: #{dqn_forward.1} parent=1 // pred_check
      _
    $region35: #{dqn_forward.1} parent=1 // pred_check_branch
      %271 = sbr.rel (0) target = $region37
    $region36: #{dqn_forward.1} parent=1 // pred_region
      %272 = dma.done [#allocation3], 128
    $region37: #{dqn_forward.1} parent=1 // pred_fallthru
      _
    %273 = vsyncpa [#allocation3], 1

</llo_original>
